<compile_context>
chip_gen: v6e
topology: v6e:2x2x1
jax: 0.10.0
libtpu: 0.0.40
codegen_flags: <defaults>
</compile_context>

<pallas_src>
import functools

import jax
import jax.numpy as jnp
from jax.experimental import pallas as pl
from jax.experimental.pallas import tpu as pltpu

LANE = 128                            # lane width
TM_MAX = 8192                         # rows per grid step (4 MiB f32 / input / block)
VMEM_LIMIT_BYTES = 32 * 1024 * 1024   # 2 inputs x 2 buffers x 4 MiB + scratch, all gens


def _corr_partial_kernel(x_ref, y_ref, out_ref, acc_ref, *,
                         rows, tm, steps, exact):
    """Per-split partial sums (sum x, y, x*y, x*x, y*y) over (tm, 128) blocks."""
    c = pl.program_id(0)          # split / core index  ("parallel")
    i = pl.program_id(1)          # step within split   ("arbitrary", reduction)
    nchunks = tm // 8

    @pl.when(i == 0)
    def _init():
        acc_ref[...] = jnp.zeros_like(acc_ref)

    def stream(valid_rows):
        """Stream the block through vregs in (8,128) chunks; one += per stat."""
        if valid_rows is not None:
            # Hoisted: JAX does not CSE broadcast_in_dim inside the loop.
            iota8 = jax.lax.broadcasted_iota(jnp.int32, (8, LANE), 0)

        def body(j, carry):
            sx, sy, sxy, sxx, syy = carry
            off = pl.multiple_of(j * 8, 8)
            xb = x_ref[pl.ds(off, 8), :].astype(jnp.float32)
            yb = y_ref[pl.ds(off, 8), :].astype(jnp.float32)
            if valid_rows is not None:
                # Block-local row mask (also zeroes Pallas OOB-pad garbage).
                keep = (off + iota8) < valid_rows
                xb = jnp.where(keep, xb, 0.0)
                yb = jnp.where(keep, yb, 0.0)
            return (sx + xb, sy + yb, sxy + xb * yb,
                    sxx + xb * xb, syy + yb * yb)

        zero = jnp.zeros((8, LANE), jnp.float32)
        sx, sy, sxy, sxx, syy = jax.lax.fori_loop(
            0, nchunks, body, (zero, zero, zero, zero, zero),
            unroll=min(8, nchunks))
        acc_ref[0] += sx
        acc_ref[1] += sy
        acc_ref[2] += sxy
        acc_ref[3] += sxx
        acc_ref[4] += syy

    if exact:
        # Every block of every split is full: no masking anywhere.
        stream(None)
    else:
        # Valid rows in this block; <= 0 for the fully-masked duplicate block
        # that an odd block count maps onto the last split.
        rem = rows - (c * steps + i) * tm

        @pl.when(rem >= tm)
        def _full_block():
            stream(None)

        @pl.when(rem < tm)
        def _tail_block():
            stream(rem)

    @pl.when(i == steps - 1)
    def _emit():
        out_ref[0] = acc_ref[...]


def correlation_coefficient_loss(y_true, y_pred):
    """Pallas implementation of CorrelationCoefficientLoss.forward."""
    assert y_true.shape == y_pred.shape
    n = y_true.size

    x = y_true.reshape(-1)
    y = y_pred.reshape(-1)

    # Pad only when unavoidable: ragged 128-tail or tiny (< 8 rows) inputs.
    # Zero padding is neutral for all five sums; n (true count) normalizes.
    min_len = 8 * LANE
    padded_len = max(min_len, ((n + LANE - 1) // LANE) * LANE)
    if padded_len != n:
        x = jnp.pad(x, (0, padded_len - n))
        y = jnp.pad(y, (0, padded_len - n))
    rows = padded_len // LANE
    x2 = x.reshape(rows, LANE)
    y2 = y.reshape(rows, LANE)

    tm = min(TM_MAX, (rows // 8) * 8)            # multiple of 8, <= rows
    total_blocks = -(-rows // tm)                # ceil-div
    num_splits = 2 if total_blocks >= 2 else 1   # v7x: one split per TensorCore
    steps = -(-total_blocks // num_splits)       # grid steps per split
    exact = (rows % tm == 0) and (num_splits * steps == total_blocks)

    if num_splits * steps == total_blocks:
        def row_block(cc, ii):
            return (cc * steps + ii, 0)
    else:
        # Odd block count: the last split's extra step re-reads the last valid
        # block (clamped index) and is fully masked out inside the kernel.
        last_block = total_blocks - 1

        def row_block(cc, ii):
            return (jnp.minimum(cc * steps + ii, last_block), 0)

    partials = pl.pallas_call(
        functools.partial(_corr_partial_kernel, rows=rows, tm=tm,
                          steps=steps, exact=exact),
        out_shape=jax.ShapeDtypeStruct((num_splits, 5, 8, LANE), jnp.float32),
        grid_spec=pltpu.PrefetchScalarGridSpec(
            num_scalar_prefetch=0,
            grid=(num_splits, steps),
            in_specs=[
                pl.BlockSpec((tm, LANE), row_block),
                pl.BlockSpec((tm, LANE), row_block),
            ],
            out_specs=pl.BlockSpec((1, 5, 8, LANE),
                                   lambda cc, ii: (cc, 0, 0, 0)),
            scratch_shapes=[pltpu.VMEM((5, 8, LANE), jnp.float32)],
        ),
        compiler_params=pltpu.CompilerParams(
            dimension_semantics=("parallel", "arbitrary"),
            vmem_limit_bytes=VMEM_LIMIT_BYTES,
        ),
    )(x2, y2)

    # ~20-flop finalize in plain JAX on the (num_splits, 5, 8, 128) partials.
    sums = jnp.sum(partials, axis=(0, 2, 3))     # (5,)
    sum_x, sum_y = sums[0], sums[1]
    sum_xy, sum_xx, sum_yy = sums[2], sums[3], sums[4]

    nf = jnp.float32(n)   # exact up to n = 2^24; ~1e-7 relative error beyond
    mean_x = sum_x / nf
    mean_y = sum_y / nf
    # covariance = mean((x - mean_x) * (y - mean_y))   (population, /n)
    cov = sum_xy / nf - mean_x * mean_y
    # torch.std default is unbiased (Bessel, /(n-1)).
    # NOTE: single-pass moment formula in f32; if |mean| >> std (or n is huge)
    # this can lose precision vs. torch's two-pass std.
    var_x = (sum_xx - nf * mean_x * mean_x) / (nf - 1.0)
    var_y = (sum_yy - nf * mean_y * mean_y) / (nf - 1.0)
    std_x = jnp.sqrt(jnp.maximum(var_x, 0.0))
    std_y = jnp.sqrt(jnp.maximum(var_y, 0.0))

    corr = cov / (std_x * std_y + jnp.float32(1e-5))
    return jnp.abs(corr)


def _reference(y_true, y_pred):
    """Pure-JAX reference matching the PyTorch forward."""
    x = y_true.astype(jnp.float32)
    y = y_pred.astype(jnp.float32)
    mean_x = jnp.mean(x)
    mean_y = jnp.mean(y)
    cov = jnp.mean((x - mean_x) * (y - mean_y))
    std_x = jnp.std(x, ddof=1)  # torch.std default: unbiased
    std_y = jnp.std(y, ddof=1)
    corr = cov / (std_x * std_y + 1e-5)
    return jnp.abs(corr)


if __name__ == "__main__":
    key = jax.random.PRNGKey(0)
    k1, k2, k3 = jax.random.split(key, 3)

    # Small NCHW-style inputs: batch=2, channels=4, spatial=16x16.
    y_true = jax.random.normal(k1, (2, 4, 16, 16), dtype=jnp.float32)
    y_pred = 0.7 * y_true + 0.3 * jax.random.normal(k2, (2, 4, 16, 16),
                                                    dtype=jnp.float32)
    loss = jax.block_until_ready(correlation_coefficient_loss(y_true, y_pred))
    ref = _reference(y_true, y_pred)
    assert jnp.allclose(loss, ref, atol=1e-5, rtol=1e-5), (loss, ref)

    # Second tiny case exercising the 2-split "parallel" grid and the masked
    # ragged tail block (13 rows -> two 8-row blocks, last one partial).
    a = jax.random.normal(k3, (13, 128), dtype=jnp.float32)
    b = 0.5 * a + 0.5 * jax.random.normal(k1, (13, 128), dtype=jnp.float32)
    loss2 = jax.block_until_ready(correlation_coefficient_loss(a, b))
    ref2 = _reference(a, b)
    assert jnp.allclose(loss2, ref2, atol=1e-5, rtol=1e-5), (loss2, ref2)

    print("KERNEL_OK")
</pallas_src>

<mosaic_0001>
module attributes {stable_mosaic.version = 11 : i64} {
  func.func @_corr_partial_kernel(%arg0: i32, %arg1: i32, %arg2: memref<16x128xf32, #tpu.memory_space<vmem>>, %arg3: memref<16x128xf32, #tpu.memory_space<vmem>>, %arg4: memref<1x5x8x128xf32, #tpu.memory_space<vmem>>, %arg5: memref<5x8x128xf32, #tpu.memory_space<vmem>>) attributes {dimension_semantics = [#tpu.dimension_semantics<parallel>, #tpu.dimension_semantics<arbitrary>], iteration_bounds = array<i64: 1, 1>, scalar_prefetch = 0 : i64, scratch_operands = 1 : i64, tpu.core_type = #tpu.core_type<tc>, window_params = [{transform_indices = @transform_0, window_bounds = array<i64: 16, 128>}, {transform_indices = @transform_1, window_bounds = array<i64: 16, 128>}, {transform_indices = @transform_2, window_bounds = array<i64: 1, 5, 8, 128>}]} {
    %c0_i32 = arith.constant 0 : i32
    %0 = arith.cmpi eq, %arg1, %c0_i32 : i32
    %1 = arith.extui %0 : i1 to i32
    %c0_i32_0 = arith.constant 0 : i32
    %2 = arith.cmpi ne, %1, %c0_i32_0 : i32
    scf.if %2 {
      %cst_34 = arith.constant 0.000000e+00 : f32
      %65 = vector.broadcast %cst_34 : f32 to vector<5x8x128xf32>
      %c0_35 = arith.constant 0 : index
      %c0_36 = arith.constant 0 : index
      %c0_37 = arith.constant 0 : index
      %66 = vector.load %arg5[%c0_35, %c0_36, %c0_37] : memref<5x8x128xf32, #tpu.memory_space<vmem>>, vector<5x8x128xf32>
      tpu.vector_store %arg5[%c0_35, %c0_36, %c0_37], %65 {strides = array<i32>} : memref<5x8x128xf32, #tpu.memory_space<vmem>>, vector<5x8x128xf32>,
    } else {
    }
    %cst = arith.constant 0.000000e+00 : f32
    %3 = vector.broadcast %cst : f32 to vector<8x128xf32>
    %c0_i32_1 = arith.constant 0 : i32
    %c8_i32 = arith.constant 8 : i32
    %4 = arith.muli %c0_i32_1, %c8_i32 : i32
    %5 = tpu.assume_multiple %4, 8 : i32
    %6 = arith.index_cast %5 : i32 to index
    %c0 = arith.constant 0 : index
    %7 = vector.load %arg2[%6, %c0] : memref<16x128xf32, #tpu.memory_space<vmem>>, vector<8x128xf32>
    %8 = arith.index_cast %5 : i32 to index
    %c0_2 = arith.constant 0 : index
    %9 = vector.load %arg3[%8, %c0_2] : memref<16x128xf32, #tpu.memory_space<vmem>>, vector<8x128xf32>
    %10 = arith.addf %3, %7 : vector<8x128xf32>
    %11 = arith.addf %3, %9 : vector<8x128xf32>
    %12 = arith.mulf %7, %9 : vector<8x128xf32>
    %13 = arith.addf %3, %12 : vector<8x128xf32>
    %14 = arith.mulf %7, %7 : vector<8x128xf32>
    %15 = arith.addf %3, %14 : vector<8x128xf32>
    %16 = arith.mulf %9, %9 : vector<8x128xf32>
    %17 = arith.addf %3, %16 : vector<8x128xf32>
    %c1_i32 = arith.constant 1 : i32
    %c8_i32_3 = arith.constant 8 : i32
    %18 = arith.muli %c1_i32, %c8_i32_3 : i32
    %19 = tpu.assume_multiple %18, 8 : i32
    %20 = arith.index_cast %19 : i32 to index
    %c0_4 = arith.constant 0 : index
    %21 = vector.load %arg2[%20, %c0_4] : memref<16x128xf32, #tpu.memory_space<vmem>>, vector<8x128xf32>
    %22 = arith.index_cast %19 : i32 to index
    %c0_5 = arith.constant 0 : index
    %23 = vector.load %arg3[%22, %c0_5] : memref<16x128xf32, #tpu.memory_space<vmem>>, vector<8x128xf32>
    %24 = arith.addf %10, %21 : vector<8x128xf32>
    %25 = arith.addf %11, %23 : vector<8x128xf32>
    %26 = arith.mulf %21, %23 : vector<8x128xf32>
    %27 = arith.addf %13, %26 : vector<8x128xf32>
    %28 = arith.mulf %21, %21 : vector<8x128xf32>
    %29 = arith.addf %15, %28 : vector<8x128xf32>
    %30 = arith.mulf %23, %23 : vector<8x128xf32>
    %31 = arith.addf %17, %30 : vector<8x128xf32>
    %c2_i32 = arith.constant 2 : i32
    %c0_6 = arith.constant 0 : index
    %c0_7 = arith.constant 0 : index
    %c0_8 = arith.constant 0 : index
    %32 = vector.load %arg5[%c0_6, %c0_7, %c0_8] : memref<5x8x128xf32, #tpu.memory_space<vmem>>, vector<1x8x128xf32>
    %33 = vector.shape_cast %32 : vector<1x8x128xf32> to vector<8x128xf32>
    %34 = arith.addf %33, %24 : vector<8x128xf32>
    %c0_9 = arith.constant 0 : index
    %c0_10 = arith.constant 0 : index
    %c0_11 = arith.constant 0 : index
    %35 = vector.load %arg5[%c0_9, %c0_10, %c0_11] : memref<5x8x128xf32, #tpu.memory_space<vmem>>, vector<1x8x128xf32>
    %36 = vector.shape_cast %35 : vector<1x8x128xf32> to vector<8x128xf32>
    %37 = vector.shape_cast %34 : vector<8x128xf32> to vector<1x8x128xf32>
    tpu.vector_store %arg5[%c0_9, %c0_10, %c0_11], %37 {strides = array<i32>} : memref<5x8x128xf32, #tpu.memory_space<vmem>>, vector<1x8x128xf32>,
    %c1 = arith.constant 1 : index
    %c0_12 = arith.constant 0 : index
    %c0_13 = arith.constant 0 : index
    %38 = vector.load %arg5[%c1, %c0_12, %c0_13] : memref<5x8x128xf32, #tpu.memory_space<vmem>>, vector<1x8x128xf32>
    %39 = vector.shape_cast %38 : vector<1x8x128xf32> to vector<8x128xf32>
    %40 = arith.addf %39, %25 : vector<8x128xf32>
    %c1_14 = arith.constant 1 : index
    %c0_15 = arith.constant 0 : index
    %c0_16 = arith.constant 0 : index
    %41 = vector.load %arg5[%c1_14, %c0_15, %c0_16] : memref<5x8x128xf32, #tpu.memory_space<vmem>>, vector<1x8x128xf32>
    %42 = vector.shape_cast %41 : vector<1x8x128xf32> to vector<8x128xf32>
    %43 = vector.shape_cast %40 : vector<8x128xf32> to vector<1x8x128xf32>
    tpu.vector_store %arg5[%c1_14, %c0_15, %c0_16], %43 {strides = array<i32>} : memref<5x8x128xf32, #tpu.memory_space<vmem>>, vector<1x8x128xf32>,
    %c2 = arith.constant 2 : index
    %c0_17 = arith.constant 0 : index
    %c0_18 = arith.constant 0 : index
    %44 = vector.load %arg5[%c2, %c0_17, %c0_18] : memref<5x8x128xf32, #tpu.memory_space<vmem>>, vector<1x8x128xf32>
    %45 = vector.shape_cast %44 : vector<1x8x128xf32> to vector<8x128xf32>
    %46 = arith.addf %45, %27 : vector<8x128xf32>
    %c2_19 = arith.constant 2 : index
    %c0_20 = arith.constant 0 : index
    %c0_21 = arith.constant 0 : index
    %47 = vector.load %arg5[%c2_19, %c0_20, %c0_21] : memref<5x8x128xf32, #tpu.memory_space<vmem>>, vector<1x8x128xf32>
    %48 = vector.shape_cast %47 : vector<1x8x128xf32> to vector<8x128xf32>
    %49 = vector.shape_cast %46 : vector<8x128xf32> to vector<1x8x128xf32>
    tpu.vector_store %arg5[%c2_19, %c0_20, %c0_21], %49 {strides = array<i32>} : memref<5x8x128xf32, #tpu.memory_space<vmem>>, vector<1x8x128xf32>,
    %c3 = arith.constant 3 : index
    %c0_22 = arith.constant 0 : index
    %c0_23 = arith.constant 0 : index
    %50 = vector.load %arg5[%c3, %c0_22, %c0_23] : memref<5x8x128xf32, #tpu.memory_space<vmem>>, vector<1x8x128xf32>
    %51 = vector.shape_cast %50 : vector<1x8x128xf32> to vector<8x128xf32>
    %52 = arith.addf %51, %29 : vector<8x128xf32>
    %c3_24 = arith.constant 3 : index
    %c0_25 = arith.constant 0 : index
    %c0_26 = arith.constant 0 : index
    %53 = vector.load %arg5[%c3_24, %c0_25, %c0_26] : memref<5x8x128xf32, #tpu.memory_space<vmem>>, vector<1x8x128xf32>
    %54 = vector.shape_cast %53 : vector<1x8x128xf32> to vector<8x128xf32>
    %55 = vector.shape_cast %52 : vector<8x128xf32> to vector<1x8x128xf32>
    tpu.vector_store %arg5[%c3_24, %c0_25, %c0_26], %55 {strides = array<i32>} : memref<5x8x128xf32, #tpu.memory_space<vmem>>, vector<1x8x128xf32>,
    %c4 = arith.constant 4 : index
    %c0_27 = arith.constant 0 : index
    %c0_28 = arith.constant 0 : index
    %56 = vector.load %arg5[%c4, %c0_27, %c0_28] : memref<5x8x128xf32, #tpu.memory_space<vmem>>, vector<1x8x128xf32>
    %57 = vector.shape_cast %56 : vector<1x8x128xf32> to vector<8x128xf32>
    %58 = arith.addf %57, %31 : vector<8x128xf32>
    %c4_29 = arith.constant 4 : index
    %c0_30 = arith.constant 0 : index
    %c0_31 = arith.constant 0 : index
    %59 = vector.load %arg5[%c4_29, %c0_30, %c0_31] : memref<5x8x128xf32, #tpu.memory_space<vmem>>, vector<1x8x128xf32>
    %60 = vector.shape_cast %59 : vector<1x8x128xf32> to vector<8x128xf32>
    %61 = vector.shape_cast %58 : vector<8x128xf32> to vector<1x8x128xf32>
    tpu.vector_store %arg5[%c4_29, %c0_30, %c0_31], %61 {strides = array<i32>} : memref<5x8x128xf32, #tpu.memory_space<vmem>>, vector<1x8x128xf32>,
    %c0_i32_32 = arith.constant 0 : i32
    %62 = arith.cmpi eq, %arg1, %c0_i32_32 : i32
    %63 = arith.extui %62 : i1 to i32
    %c0_i32_33 = arith.constant 0 : i32
    %64 = arith.cmpi ne, %63, %c0_i32_33 : i32
    scf.if %64 {
      %c0_34 = arith.constant 0 : index
      %c0_35 = arith.constant 0 : index
      %c0_36 = arith.constant 0 : index
      %65 = vector.load %arg5[%c0_34, %c0_35, %c0_36] : memref<5x8x128xf32, #tpu.memory_space<vmem>>, vector<5x8x128xf32>
      %c0_37 = arith.constant 0 : index
      %c0_38 = arith.constant 0 : index
      %c0_39 = arith.constant 0 : index
      %c0_40 = arith.constant 0 : index
      %66 = vector.load %arg4[%c0_37, %c0_38, %c0_39, %c0_40] : memref<1x5x8x128xf32, #tpu.memory_space<vmem>>, vector<1x5x8x128xf32>
      %67 = vector.shape_cast %66 : vector<1x5x8x128xf32> to vector<5x8x128xf32>
      %68 = vector.shape_cast %65 : vector<5x8x128xf32> to vector<1x5x8x128xf32>
      tpu.vector_store %arg4[%c0_37, %c0_38, %c0_39, %c0_40], %68 {strides = array<i32>} : memref<1x5x8x128xf32, #tpu.memory_space<vmem>>, vector<1x5x8x128xf32>,
    } else {
    }
    return
  }
  func.func @transform_0(%arg0: i32, %arg1: i32) -> (i32, i32) {
    %c1_i32 = arith.constant 1 : i32
    %0 = arith.muli %arg0, %c1_i32 : i32
    %1 = arith.addi %0, %arg1 : i32
    %c0_i32 = arith.constant 0 : i32
    %c0_i32_0 = arith.constant 0 : i32
    return %1, %c0_i32 : i32, i32
  }
  func.func @transform_1(%arg0: i32, %arg1: i32) -> (i32, i32) {
    %c1_i32 = arith.constant 1 : i32
    %0 = arith.muli %arg0, %c1_i32 : i32
    %1 = arith.addi %0, %arg1 : i32
    %c0_i32 = arith.constant 0 : i32
    %c0_i32_0 = arith.constant 0 : i32
    return %1, %c0_i32 : i32, i32
  }
  func.func @transform_2(%arg0: i32, %arg1: i32) -> (i32, i32, i32, i32) {
    %c0_i32 = arith.constant 0 : i32
    %c0_i32_0 = arith.constant 0 : i32
    %c0_i32_1 = arith.constant 0 : i32
    %c0_i32_2 = arith.constant 0 : i32
    return %arg0, %c0_i32, %c0_i32_0, %c0_i32_1 : i32, i32, i32, i32
  }
}

</mosaic_0001>

<llo_original>
// kernel: tpu_custom_call.1
$region0: #{tpu_custom_call.1}
  #allocation0 [shape = 'u32[]', space=smem, size = 0x4, offset = 0x4, fixed_abs, tag = 'smem constant byte address 0x4 - core index']
  #allocation1 [shape = 'u32[144,128]{1,0:T(1,128)}', space=vmem, size = 0x12000, scoped, tag = 'internal scratch']
  #allocation2 [shape = 'f32[5,8,128]{2,1,0:T(8,128)}', space=vmem, size = 0x5000, scoped, tag = 'scratch operand']
  %s0 = inlined_call_operand.hbm [shape: f32[16,128], index: 0, kind: input, shape index: {}]
  %s1 = inlined_call_operand.hbm [shape: f32[16,128], index: 1, kind: input, shape index: {}]
  %s2 = inlined_call_operand.hbm [shape: f32[1,5,8,128], index: 2, kind: output, shape index: {}]
  %s3 = sld [smem:[#allocation0]]
  $region34: #{tpu_custom_call.1} parent=0
    _
  %s5 = ssub.s32 1, %s3
  %s6 = scalar_select 0, %s5, %s3
  $region1: #{tpu_custom_call.1} parent=0
    #allocation3 [shape = 'u8[8192]{0}', space=vmem, size = 0x2000, scoped, tag = 'input window, operand 0, single buffered']
    #allocation4 [shape = 's32[1]{0}', space=sflag, size = 0x4, scoped, tag = 'scoped memory for tpu_custom_call.1']
    #allocation5 [shape = 's32[1]{0}', space=sflag, size = 0x4, scoped, tag = 'scoped memory for tpu_custom_call.1']
    #allocation6 [shape = 'u8[8192]{0}', space=vmem, size = 0x2000, scoped, tag = 'input window, operand 1, single buffered']
    #allocation7 [shape = 's32[1]{0}', space=sflag, size = 0x4, scoped, tag = 'scoped memory for tpu_custom_call.1']
    #allocation8 [shape = 'u8[20480]{0}', space=vmem, size = 0x5000, scoped, tag = 'output window, operand 0, single buffered']
    %7 = vsyncpa [#allocation4], 0
    %8 = vsyncpa [#allocation7], 0
    %9 = vsyncpa [#allocation5], 0
    // Predicated region
    $region2: #{tpu_custom_call.1} parent=1 // pred_check
      _
    $region3: #{tpu_custom_call.1} parent=1 // pred_check_branch
      %11 = sbr.rel (0) target = $region5
    $region4: #{tpu_custom_call.1} parent=1 // pred_region
      %s12 = sadd.s32 0, 0
      %s13 = smul.u32 2, %s12
      %s15 = ssub.s32 256, 256
      %16 = vsyncadd [#allocation4], %s15
      %s17 = smul.addr %s13, 128
      %s18 = scalar_lea.hbm %s0, %s17
      %s19 = sshll.u32 [#allocation3], 4
      %s20 = int_to_ptr.vmem [resolvable:$true] %s19
      %25 = dma.hbm_to_vmem [thread:$0]  %s18, 256, %s20, [#allocation4], 128, 128, 8
    $region5: #{tpu_custom_call.1} parent=1 // pred_fallthru
      _
    // Predicated region
    $region6: #{tpu_custom_call.1} parent=1 // pred_check
      _
    $region7: #{tpu_custom_call.1} parent=1 // pred_check_branch
      %27 = sbr.rel (0) target = $region9
    $region8: #{tpu_custom_call.1} parent=1 // pred_region
      %s28 = sadd.s32 0, 0
      %s29 = smul.u32 2, %s28
      %s31 = ssub.s32 256, 256
      %32 = vsyncadd [#allocation7], %s31
      %s33 = smul.addr %s29, 128
      %s34 = scalar_lea.hbm %s1, %s33
      %s35 = sshll.u32 [#allocation6], 4
      %s36 = int_to_ptr.vmem [resolvable:$true] %s35
      %41 = dma.hbm_to_vmem [thread:$0]  %s34, 256, %s36, [#allocation7], 128, 128, 8
    $region9: #{tpu_custom_call.1} parent=1 // pred_fallthru
      _
    // Predicated region
    $region10: #{tpu_custom_call.1} parent=1 // pred_check
      _
    $region11: #{tpu_custom_call.1} parent=1 // pred_check_branch
      %43 = sbr.rel (0) target = $region13
    $region12: #{tpu_custom_call.1} parent=1 // pred_region
      %44 = dma.done [#allocation4], 256
    $region13: #{tpu_custom_call.1} parent=1 // pred_fallthru
      _
    // Predicated region
    $region14: #{tpu_custom_call.1} parent=1 // pred_check
      _
    $region15: #{tpu_custom_call.1} parent=1 // pred_check_branch
      %46 = sbr.rel (0) target = $region17
    $region16: #{tpu_custom_call.1} parent=1 // pred_region
      %47 = dma.done [#allocation7], 256
    $region17: #{tpu_custom_call.1} parent=1 // pred_fallthru
      _
    %s48 = sadd.s32 0, 0
    %s49 = smul.u32 2, %s48
    %s50 = sadd.s32 0, 0
    %s51 = smul.u32 2, %s50
    %p52 = scmp.eq.s32.totalorder 0, 0
    // Predicated region
    $region18: #{tpu_custom_call.1} parent=1 // pred_check
      %p53 = pneg %p52
    $region19: #{tpu_custom_call.1} parent=1 // pred_check_branch
      %55 = sbr.rel (%p53) target = $region21
    $region20: #{tpu_custom_call.1} parent=1 // pred_region
      %56 = vst [vmem:[#allocation2] sm:$0xff] 0.0
      %57 = vst [vmem:[#allocation2 + $0x8] sm:$0xff] 0.0
      %58 = vst [vmem:[#allocation2 + $0x10] sm:$0xff] 0.0
      %59 = vst [vmem:[#allocation2 + $0x18] sm:$0xff] 0.0
      %60 = vst [vmem:[#allocation2 + $0x20] sm:$0xff] 0.0
    $region21: #{tpu_custom_call.1} parent=1 // pred_fallthru
      _
    %v61 = vld [vmem:[#allocation3] sm:$0xff]
    %v62 = vld [vmem:[#allocation6] sm:$0xff]
    %v63 = vadd.f32 %v61, 0.0
    %v64 = vadd.f32 %v62, 0.0
    %v65 = vmul.f32 %v61, %v62
    %v66 = vadd.f32 %v65, 0.0
    %v67 = vmul.f32 %v61, %v61
    %v68 = vadd.f32 %v67, 0.0
    %v69 = vmul.f32 %v62, %v62
    %v70 = vadd.f32 %v69, 0.0
    %s71 = scalar_lea.vmem [#allocation3], 8
    %v72 = vld [vmem:[%s71] sm:$0xff]
    %s73 = scalar_lea.vmem [#allocation6], 8
    %v74 = vld [vmem:[%s73] sm:$0xff]
    %v75 = vadd.f32 %v63, %v72
    %v76 = vadd.f32 %v64, %v74
    %v77 = vmul.f32 %v72, %v74
    %v78 = vadd.f32 %v66, %v77
    %v79 = vmul.f32 %v72, %v72
    %v80 = vadd.f32 %v68, %v79
    %v81 = vmul.f32 %v74, %v74
    %v82 = vadd.f32 %v70, %v81
    %v83 = vld [vmem:[#allocation2] sm:$0xff]
    %v84 = vadd.f32 %v83, %v75
    %85 = vst [vmem:[#allocation2] sm:$0xff] %v84
    %s86 = scalar_lea.vmem [#allocation2], 8
    %v87 = vld [vmem:[%s86] sm:$0xff]
    %v88 = vadd.f32 %v87, %v76
    %89 = vst [vmem:[%s86] sm:$0xff] %v88
    %s90 = scalar_lea.vmem [#allocation2], 16
    %v91 = vld [vmem:[%s90] sm:$0xff]
    %v92 = vadd.f32 %v91, %v78
    %93 = vst [vmem:[%s90] sm:$0xff] %v92
    %s94 = scalar_lea.vmem [#allocation2], 24
    %v95 = vld [vmem:[%s94] sm:$0xff]
    %v96 = vadd.f32 %v95, %v80
    %97 = vst [vmem:[%s94] sm:$0xff] %v96
    %s98 = scalar_lea.vmem [#allocation2], 32
    %v99 = vld [vmem:[%s98] sm:$0xff]
    %v100 = vadd.f32 %v99, %v82
    %101 = vst [vmem:[%s98] sm:$0xff] %v100
    // Predicated region
    $region22: #{tpu_custom_call.1} parent=1 // pred_check
      %p102 = pneg %p52
    $region23: #{tpu_custom_call.1} parent=1 // pred_check_branch
      %104 = sbr.rel (%p102) target = $region25
    $region24: #{tpu_custom_call.1} parent=1 // pred_region
      %v105 = vld [vmem:[#allocation2] sm:$0xff]
      %v106 = vld [vmem:[#allocation2 + $0x8] sm:$0xff]
      %v107 = vld [vmem:[#allocation2 + $0x10] sm:$0xff]
      %v108 = vld [vmem:[#allocation2 + $0x18] sm:$0xff]
      %v109 = vld [vmem:[#allocation2 + $0x20] sm:$0xff]
      %110 = vst [vmem:[#allocation8] sm:$0xff] %v105
      %111 = vst [vmem:[#allocation8 + $0x8] sm:$0xff] %v106
      %112 = vst [vmem:[#allocation8 + $0x10] sm:$0xff] %v107
      %113 = vst [vmem:[#allocation8 + $0x18] sm:$0xff] %v108
      %114 = vst [vmem:[#allocation8 + $0x20] sm:$0xff] %v109
    $region25: #{tpu_custom_call.1} parent=1 // pred_fallthru
      _
    // Predicated region
    $region26: #{tpu_custom_call.1} parent=1 // pred_check
      _
    $region27: #{tpu_custom_call.1} parent=1 // pred_check_branch
      %116 = sbr.rel (0) target = $region29
    $region28: #{tpu_custom_call.1} parent=1 // pred_region
      %s118 = ssub.s32 640, 640
      %119 = vsyncadd [#allocation5], %s118
      %s120 = sshll.u32 [#allocation8], 4
      %s121 = int_to_ptr.vmem [resolvable:$true] %s120
      %126 = dma.vmem_to_hbm [thread:$0]  %s121, 640, %s2, [#allocation5], 128, 128, 8
    $region29: #{tpu_custom_call.1} parent=1 // pred_fallthru
      _
    // Predicated region
    $region30: #{tpu_custom_call.1} parent=1 // pred_check
      _
    $region31: #{tpu_custom_call.1} parent=1 // pred_check_branch
      %128 = sbr.rel (0) target = $region33
    $region32: #{tpu_custom_call.1} parent=1 // pred_region
      %129 = dma.done [#allocation5], 640
    $region33: #{tpu_custom_call.1} parent=1 // pred_fallthru
      _
    %130 = vsyncpa [#allocation4], 1
    %131 = vsyncpa [#allocation7], 1
    %132 = vsyncpa [#allocation5], 1

</llo_original>
